<compile_context>
chip_gen: v6e
topology: v6e:2x2x1
jax: 0.10.0
libtpu: 0.0.40
codegen_flags: <defaults>
</compile_context>

<pallas_src>
import functools

import jax
import jax.numpy as jnp
from jax.experimental import pallas as pl
from jax.experimental.pallas import tpu as pltpu


def _ce_dice_kernel(p_ref, l_ref, bce_out_ref, dice_out_ref,
                    inter_acc, pred_acc, gt_acc, bce_acc, *, smooth):
    """Grid = (row_tiles, L_tiles); L (spatial) is the innermost reduction axis.

    Per row (= one (n, c) pair) we accumulate across L tiles:
      inter_acc = sum(sigmoid(x) * y),  pred_acc = sum(sigmoid(x)),
      gt_acc    = sum(y),               bce_acc  = sum(per-element BCE terms).
    On the last L tile we emit per-row BCE sums and per-row (1 - dice).
    """
    j = pl.program_id(1)

    @pl.when(j == 0)
    def _init():
        inter_acc[...] = jnp.zeros_like(inter_acc)
        pred_acc[...] = jnp.zeros_like(pred_acc)
        gt_acc[...] = jnp.zeros_like(gt_acc)
        bce_acc[...] = jnp.zeros_like(bce_acc)

    x = p_ref[...].astype(jnp.float32)   # logits
    y = l_ref[...].astype(jnp.float32)   # labels

    # One transcendental shared between BCE and sigmoid.
    e = jnp.exp(-jnp.abs(x))
    # Stable BCE-with-logits per element: max(x,0) - x*y + log(1 + exp(-|x|))
    bce = jnp.maximum(x, 0.0) - x * y + jnp.log1p(e)
    # sigmoid(x): x >= 0 -> 1/(1+e) ; x < 0 -> e/(1+e)   (exact, same e)
    r = 1.0 / (1.0 + e)
    s = jnp.where(x >= 0.0, r, e * r)

    bce_acc[...] += jnp.sum(bce, axis=1, keepdims=True)
    inter_acc[...] += jnp.sum(s * y, axis=1, keepdims=True)
    pred_acc[...] += jnp.sum(s, axis=1, keepdims=True)
    gt_acc[...] += jnp.sum(y, axis=1, keepdims=True)

    @pl.when(j == pl.num_programs(1) - 1)
    def _finalize():
        dice = 2.0 * inter_acc[...] / (pred_acc[...] + gt_acc[...] + smooth)
        dice_out_ref[...] = 1.0 - dice
        bce_out_ref[...] = bce_acc[...]


def _pick_tile(total, align, cap):
    """Largest divisor of `total` that is a multiple of `align` and <= cap.

    Falls back to the full extent (always a legal block size) when `total`
    is small or has no aligned divisor.
    """
    if total <= cap:
        return total
    if total % align:
        return total
    t = (cap // align) * align
    while t >= align:
        if total % t == 0:
            return t
        t -= align
    return total


def ce_dice_loss(preds, labels, *, weight_ce=1.0, weight_dice=1.0, smooth=1e-4):
    """preds, labels: (N, C, H, W) (any float dtype). Returns scalar f32 loss."""
    N, C, H, W = preds.shape
    R, L = N * C, H * W

    # No up-cast here: keep native dtype in HBM; the kernel widens in VMEM.
    p2 = preds.reshape(R, L)
    l2 = labels.reshape(R, L)

    # Tile sizing: ~2 MiB (f32-equivalent) per input block.
    #   -> 2 inputs x 2 pipeline buffers ~= 8 MiB resident, safe on v5e's
    #      16 MiB default scoped VMEM and well under v6e/v7x limits.
    target_block_elems = 512 * 1024
    l_tile = _pick_tile(L, 128, 65536)
    row_tile = _pick_tile(R, 8, max(8, target_block_elems // max(l_tile, 1)))
    grid = (R // row_tile, L // l_tile)

    kernel = functools.partial(_ce_dice_kernel, smooth=float(smooth))

    bce_rows, dice_rows = pl.pallas_call(
        kernel,
        out_shape=(
            jax.ShapeDtypeStruct((R, 1), jnp.float32),   # per-row BCE sums
            jax.ShapeDtypeStruct((R, 1), jnp.float32),   # per-row (1 - dice)
        ),
        grid_spec=pltpu.PrefetchScalarGridSpec(
            num_scalar_prefetch=0,
            grid=grid,
            in_specs=[
                pl.BlockSpec((row_tile, l_tile), lambda i, j: (i, j)),
                pl.BlockSpec((row_tile, l_tile), lambda i, j: (i, j)),
            ],
            out_specs=[
                pl.BlockSpec((row_tile, 1), lambda i, j: (i, 0)),
                pl.BlockSpec((row_tile, 1), lambda i, j: (i, 0)),
            ],
            scratch_shapes=[
                pltpu.VMEM((row_tile, 1), jnp.float32),   # intersection
                pltpu.VMEM((row_tile, 1), jnp.float32),   # sum(sigmoid)
                pltpu.VMEM((row_tile, 1), jnp.float32),   # sum(labels)
                pltpu.VMEM((row_tile, 1), jnp.float32),   # bce partial sum
            ],
        ),
        compiler_params=pltpu.CompilerParams(
            # Row tiles are independent -> shardable across v7x's 2 TCs;
            # L is the reduction axis (accumulator-resident output).
            dimension_semantics=("parallel", "arbitrary"),
        ),
    )(p2, l2)

    # Tiny final reductions + loss weighting in plain JAX (precise tree sums).
    loss_ce = jnp.sum(bce_rows) / jnp.float32(R * L)
    loss_dice = jnp.mean(dice_rows)
    return jnp.float32(weight_ce) * loss_ce + jnp.float32(weight_dice) * loss_dice


def _reference(preds, labels, *, weight_ce=1.0, weight_dice=1.0, smooth=1e-4):
    # Pure-JAX reference mirroring the PyTorch forward.
    x = preds.astype(jnp.float32)
    y = labels.astype(jnp.float32)
    bce = jnp.maximum(x, 0.0) - x * y + jnp.log1p(jnp.exp(-jnp.abs(x)))
    loss_ce = jnp.mean(bce)
    s = jax.nn.sigmoid(x)
    axes = tuple(range(2, x.ndim))
    intersection = jnp.sum(s * y, axis=axes)
    summ = jnp.sum(s, axis=axes) + jnp.sum(y, axis=axes)
    dice = 2.0 * intersection / (summ + smooth)
    loss_dice = jnp.mean(1.0 - dice)
    return weight_ce * loss_ce + weight_dice * loss_dice


if __name__ == "__main__":
    key = jax.random.PRNGKey(0)
    k1, k2 = jax.random.split(key)

    N, C, H, W = 2, 4, 16, 16
    preds = jax.random.normal(k1, (N, C, H, W), dtype=jnp.float32)
    labels = (jax.random.uniform(k2, (N, C, H, W)) > 0.5).astype(jnp.float32)

    loss = ce_dice_loss(preds, labels)
    loss = jax.block_until_ready(loss)

    ref = _reference(preds, labels)
    assert jnp.allclose(loss, ref, rtol=1e-5, atol=1e-5), (loss, ref)

    print("KERNEL_OK")
</pallas_src>

<mosaic_0001>
module attributes {stable_mosaic.version = 11 : i64} {
  func.func @_ce_dice_kernel(%arg0: i32, %arg1: i32, %arg2: memref<8x256xf32, #tpu.memory_space<vmem>>, %arg3: memref<8x256xf32, #tpu.memory_space<vmem>>, %arg4: memref<8x1xf32, #tpu.memory_space<vmem>>, %arg5: memref<8x1xf32, #tpu.memory_space<vmem>>, %arg6: memref<8x1xf32, #tpu.memory_space<vmem>>, %arg7: memref<8x1xf32, #tpu.memory_space<vmem>>, %arg8: memref<8x1xf32, #tpu.memory_space<vmem>>, %arg9: memref<8x1xf32, #tpu.memory_space<vmem>>) attributes {dimension_semantics = [#tpu.dimension_semantics<parallel>, #tpu.dimension_semantics<arbitrary>], iteration_bounds = array<i64: 1, 1>, scalar_prefetch = 0 : i64, scratch_operands = 4 : i64, tpu.core_type = #tpu.core_type<tc>, window_params = [{transform_indices = @transform_0, window_bounds = array<i64: 8, 256>}, {transform_indices = @transform_1, window_bounds = array<i64: 8, 256>}, {transform_indices = @transform_2, window_bounds = array<i64: 8, 1>}, {transform_indices = @transform_3, window_bounds = array<i64: 8, 1>}]} {
    %c0_i32 = arith.constant 0 : i32
    %0 = arith.cmpi eq, %arg1, %c0_i32 : i32
    %1 = arith.extui %0 : i1 to i32
    %c0_i32_0 = arith.constant 0 : i32
    %2 = arith.cmpi ne, %1, %c0_i32_0 : i32
    scf.if %2 {
      %cst_30 = arith.constant 0.000000e+00 : f32
      %47 = vector.broadcast %cst_30 : f32 to vector<8x1xf32>
      %c0_31 = arith.constant 0 : index
      %c0_32 = arith.constant 0 : index
      %48 = vector.load %arg6[%c0_31, %c0_32] : memref<8x1xf32, #tpu.memory_space<vmem>>, vector<8x1xf32>
      tpu.vector_store %arg6[%c0_31, %c0_32], %47 {strides = array<i32>} : memref<8x1xf32, #tpu.memory_space<vmem>>, vector<8x1xf32>,
      %cst_33 = arith.constant 0.000000e+00 : f32
      %49 = vector.broadcast %cst_33 : f32 to vector<8x1xf32>
      %c0_34 = arith.constant 0 : index
      %c0_35 = arith.constant 0 : index
      %50 = vector.load %arg7[%c0_34, %c0_35] : memref<8x1xf32, #tpu.memory_space<vmem>>, vector<8x1xf32>
      tpu.vector_store %arg7[%c0_34, %c0_35], %49 {strides = array<i32>} : memref<8x1xf32, #tpu.memory_space<vmem>>, vector<8x1xf32>,
      %cst_36 = arith.constant 0.000000e+00 : f32
      %51 = vector.broadcast %cst_36 : f32 to vector<8x1xf32>
      %c0_37 = arith.constant 0 : index
      %c0_38 = arith.constant 0 : index
      %52 = vector.load %arg8[%c0_37, %c0_38] : memref<8x1xf32, #tpu.memory_space<vmem>>, vector<8x1xf32>
      tpu.vector_store %arg8[%c0_37, %c0_38], %51 {strides = array<i32>} : memref<8x1xf32, #tpu.memory_space<vmem>>, vector<8x1xf32>,
      %cst_39 = arith.constant 0.000000e+00 : f32
      %53 = vector.broadcast %cst_39 : f32 to vector<8x1xf32>
      %c0_40 = arith.constant 0 : index
      %c0_41 = arith.constant 0 : index
      %54 = vector.load %arg9[%c0_40, %c0_41] : memref<8x1xf32, #tpu.memory_space<vmem>>, vector<8x1xf32>
      tpu.vector_store %arg9[%c0_40, %c0_41], %53 {strides = array<i32>} : memref<8x1xf32, #tpu.memory_space<vmem>>, vector<8x1xf32>,
    } else {
    }
    %c0 = arith.constant 0 : index
    %c0_1 = arith.constant 0 : index
    %3 = vector.load %arg2[%c0, %c0_1] : memref<8x256xf32, #tpu.memory_space<vmem>>, vector<8x256xf32>
    %c0_2 = arith.constant 0 : index
    %c0_3 = arith.constant 0 : index
    %4 = vector.load %arg3[%c0_2, %c0_3] : memref<8x256xf32, #tpu.memory_space<vmem>>, vector<8x256xf32>
    %5 = math.absf %3 : vector<8x256xf32>
    %cst = arith.constant 0.000000e+00 : f32
    %6 = vector.broadcast %cst : f32 to vector<8x256xf32>
    %7 = arith.subf %6, %5 : vector<8x256xf32>
    %8 = math.exp %7 : vector<8x256xf32>
    %cst_4 = arith.constant 0.000000e+00 : f32
    %9 = vector.broadcast %cst_4 : f32 to vector<8x256xf32>
    %10 = arith.maximumf %3, %9 : vector<8x256xf32>
    %11 = arith.mulf %3, %4 : vector<8x256xf32>
    %12 = arith.subf %10, %11 : vector<8x256xf32>
    %13 = math.log1p %8 : vector<8x256xf32>
    %14 = arith.addf %12, %13 : vector<8x256xf32>
    %cst_5 = arith.constant 1.000000e+00 : f32
    %15 = vector.broadcast %cst_5 : f32 to vector<8x256xf32>
    %16 = arith.addf %15, %8 : vector<8x256xf32>
    %cst_6 = arith.constant 1.000000e+00 : f32
    %17 = vector.broadcast %cst_6 : f32 to vector<8x256xf32>
    %18 = arith.divf %17, %16 : vector<8x256xf32>
    %cst_7 = arith.constant 0.000000e+00 : f32
    %19 = vector.broadcast %cst_7 : f32 to vector<8x256xf32>
    %20 = arith.cmpf oge, %3, %19 : vector<8x256xf32>
    %21 = arith.mulf %8, %18 : vector<8x256xf32>
    %22 = arith.select %20, %18, %21 : vector<8x256xi1>, vector<8x256xf32>
    %c0_8 = arith.constant 0 : index
    %c0_9 = arith.constant 0 : index
    %23 = vector.load %arg9[%c0_8, %c0_9] : memref<8x1xf32, #tpu.memory_space<vmem>>, vector<8x1xf32>
    %cst_10 = arith.constant dense<0.000000e+00> : vector<8xf32>
    %24 = vector.multi_reduction <add>, %14, %cst_10 [1] : vector<8x256xf32> to vector<8xf32>
    %25 = vector.shape_cast %24 : vector<8xf32> to vector<8x1xf32>
    %26 = arith.addf %23, %25 : vector<8x1xf32>
    %c0_11 = arith.constant 0 : index
    %c0_12 = arith.constant 0 : index
    %27 = vector.load %arg9[%c0_11, %c0_12] : memref<8x1xf32, #tpu.memory_space<vmem>>, vector<8x1xf32>
    tpu.vector_store %arg9[%c0_11, %c0_12], %26 {strides = array<i32>} : memref<8x1xf32, #tpu.memory_space<vmem>>, vector<8x1xf32>,
    %c0_13 = arith.constant 0 : index
    %c0_14 = arith.constant 0 : index
    %28 = vector.load %arg6[%c0_13, %c0_14] : memref<8x1xf32, #tpu.memory_space<vmem>>, vector<8x1xf32>
    %29 = arith.mulf %22, %4 : vector<8x256xf32>
    %cst_15 = arith.constant dense<0.000000e+00> : vector<8xf32>
    %30 = vector.multi_reduction <add>, %29, %cst_15 [1] : vector<8x256xf32> to vector<8xf32>
    %31 = vector.shape_cast %30 : vector<8xf32> to vector<8x1xf32>
    %32 = arith.addf %28, %31 : vector<8x1xf32>
    %c0_16 = arith.constant 0 : index
    %c0_17 = arith.constant 0 : index
    %33 = vector.load %arg6[%c0_16, %c0_17] : memref<8x1xf32, #tpu.memory_space<vmem>>, vector<8x1xf32>
    tpu.vector_store %arg6[%c0_16, %c0_17], %32 {strides = array<i32>} : memref<8x1xf32, #tpu.memory_space<vmem>>, vector<8x1xf32>,
    %c0_18 = arith.constant 0 : index
    %c0_19 = arith.constant 0 : index
    %34 = vector.load %arg7[%c0_18, %c0_19] : memref<8x1xf32, #tpu.memory_space<vmem>>, vector<8x1xf32>
    %cst_20 = arith.constant dense<0.000000e+00> : vector<8xf32>
    %35 = vector.multi_reduction <add>, %22, %cst_20 [1] : vector<8x256xf32> to vector<8xf32>
    %36 = vector.shape_cast %35 : vector<8xf32> to vector<8x1xf32>
    %37 = arith.addf %34, %36 : vector<8x1xf32>
    %c0_21 = arith.constant 0 : index
    %c0_22 = arith.constant 0 : index
    %38 = vector.load %arg7[%c0_21, %c0_22] : memref<8x1xf32, #tpu.memory_space<vmem>>, vector<8x1xf32>
    tpu.vector_store %arg7[%c0_21, %c0_22], %37 {strides = array<i32>} : memref<8x1xf32, #tpu.memory_space<vmem>>, vector<8x1xf32>,
    %c0_23 = arith.constant 0 : index
    %c0_24 = arith.constant 0 : index
    %39 = vector.load %arg8[%c0_23, %c0_24] : memref<8x1xf32, #tpu.memory_space<vmem>>, vector<8x1xf32>
    %cst_25 = arith.constant dense<0.000000e+00> : vector<8xf32>
    %40 = vector.multi_reduction <add>, %4, %cst_25 [1] : vector<8x256xf32> to vector<8xf32>
    %41 = vector.shape_cast %40 : vector<8xf32> to vector<8x1xf32>
    %42 = arith.addf %39, %41 : vector<8x1xf32>
    %c0_26 = arith.constant 0 : index
    %c0_27 = arith.constant 0 : index
    %43 = vector.load %arg8[%c0_26, %c0_27] : memref<8x1xf32, #tpu.memory_space<vmem>>, vector<8x1xf32>
    tpu.vector_store %arg8[%c0_26, %c0_27], %42 {strides = array<i32>} : memref<8x1xf32, #tpu.memory_space<vmem>>, vector<8x1xf32>,
    %c0_i32_28 = arith.constant 0 : i32
    %44 = arith.cmpi eq, %arg1, %c0_i32_28 : i32
    %45 = arith.extui %44 : i1 to i32
    %c0_i32_29 = arith.constant 0 : i32
    %46 = arith.cmpi ne, %45, %c0_i32_29 : i32
    scf.if %46 {
      %c0_30 = arith.constant 0 : index
      %c0_31 = arith.constant 0 : index
      %47 = vector.load %arg6[%c0_30, %c0_31] : memref<8x1xf32, #tpu.memory_space<vmem>>, vector<8x1xf32>
      %cst_32 = arith.constant 2.000000e+00 : f32
      %48 = vector.broadcast %cst_32 : f32 to vector<8x1xf32>
      %49 = arith.mulf %48, %47 : vector<8x1xf32>
      %c0_33 = arith.constant 0 : index
      %c0_34 = arith.constant 0 : index
      %50 = vector.load %arg7[%c0_33, %c0_34] : memref<8x1xf32, #tpu.memory_space<vmem>>, vector<8x1xf32>
      %c0_35 = arith.constant 0 : index
      %c0_36 = arith.constant 0 : index
      %51 = vector.load %arg8[%c0_35, %c0_36] : memref<8x1xf32, #tpu.memory_space<vmem>>, vector<8x1xf32>
      %52 = arith.addf %50, %51 : vector<8x1xf32>
      %cst_37 = arith.constant 9.99999974E-5 : f32
      %53 = vector.broadcast %cst_37 : f32 to vector<8x1xf32>
      %54 = arith.addf %52, %53 : vector<8x1xf32>
      %55 = arith.divf %49, %54 : vector<8x1xf32>
      %cst_38 = arith.constant 1.000000e+00 : f32
      %56 = vector.broadcast %cst_38 : f32 to vector<8x1xf32>
      %57 = arith.subf %56, %55 : vector<8x1xf32>
      %c0_39 = arith.constant 0 : index
      %c0_40 = arith.constant 0 : index
      %58 = vector.load %arg5[%c0_39, %c0_40] : memref<8x1xf32, #tpu.memory_space<vmem>>, vector<8x1xf32>
      tpu.vector_store %arg5[%c0_39, %c0_40], %57 {strides = array<i32>} : memref<8x1xf32, #tpu.memory_space<vmem>>, vector<8x1xf32>,
      %c0_41 = arith.constant 0 : index
      %c0_42 = arith.constant 0 : index
      %59 = vector.load %arg9[%c0_41, %c0_42] : memref<8x1xf32, #tpu.memory_space<vmem>>, vector<8x1xf32>
      %c0_43 = arith.constant 0 : index
      %c0_44 = arith.constant 0 : index
      %60 = vector.load %arg4[%c0_43, %c0_44] : memref<8x1xf32, #tpu.memory_space<vmem>>, vector<8x1xf32>
      tpu.vector_store %arg4[%c0_43, %c0_44], %59 {strides = array<i32>} : memref<8x1xf32, #tpu.memory_space<vmem>>, vector<8x1xf32>,
    } else {
    }
    return
  }
  func.func @transform_0(%arg0: i32, %arg1: i32) -> (i32, i32) {
    %c0_i32 = arith.constant 0 : i32
    return %arg0, %arg1 : i32, i32
  }
  func.func @transform_1(%arg0: i32, %arg1: i32) -> (i32, i32) {
    %c0_i32 = arith.constant 0 : i32
    return %arg0, %arg1 : i32, i32
  }
  func.func @transform_2(%arg0: i32, %arg1: i32) -> (i32, i32) {
    %c0_i32 = arith.constant 0 : i32
    %c0_i32_0 = arith.constant 0 : i32
    return %arg0, %c0_i32 : i32, i32
  }
  func.func @transform_3(%arg0: i32, %arg1: i32) -> (i32, i32) {
    %c0_i32 = arith.constant 0 : i32
    %c0_i32_0 = arith.constant 0 : i32
    return %arg0, %c0_i32 : i32, i32
  }
}

</mosaic_0001>

<llo_original>
// kernel: tpu_custom_call.1
$region0: #{tpu_custom_call.1}
  #allocation0 [shape = 'u32[]', space=smem, size = 0x4, offset = 0x4, fixed_abs, tag = 'smem constant byte address 0x4 - core index']
  #allocation1 [shape = 'u32[144,128]{1,0:T(1,128)}', space=vmem, size = 0x12000, scoped, tag = 'internal scratch']
  #allocation2 [shape = 'f32[8,1]{1,0:T(8,128)}', space=vmem, size = 0x1000, scoped, tag = 'scratch operand']
  #allocation3 [shape = 'f32[8,1]{1,0:T(8,128)}', space=vmem, size = 0x1000, scoped, tag = 'scratch operand']
  #allocation4 [shape = 'f32[8,1]{1,0:T(8,128)}', space=vmem, size = 0x1000, scoped, tag = 'scratch operand']
  #allocation5 [shape = 'f32[8,1]{1,0:T(8,128)}', space=vmem, size = 0x1000, scoped, tag = 'scratch operand']
  %s0 = inlined_call_operand.hbm [shape: f32[8,256], index: 0, kind: input, shape index: {}]
  %s1 = inlined_call_operand.hbm [shape: f32[8,256], index: 1, kind: input, shape index: {}]
  %s2 = inlined_call_operand.vmem [shape: f32[8,1], index: 2, kind: output, shape index: {0}]
  %s3 = inlined_call_operand.vmem [shape: f32[8,1], index: 3, kind: output, shape index: {1}]
  %4 = xla_tuple %s2, %s3
  %s5 = sld [smem:[#allocation0]]
  $region42: #{tpu_custom_call.1} parent=0
    _
  %s7 = ssub.s32 1, %s5
  %s8 = scalar_select 0, %s7, %s5
  $region1: #{tpu_custom_call.1} parent=0
    #allocation6 [shape = 'u8[8192]{0}', space=vmem, size = 0x2000, scoped, tag = 'input window, operand 0, single buffered']
    #allocation7 [shape = 's32[1]{0}', space=sflag, size = 0x4, scoped, tag = 'scoped memory for tpu_custom_call.1']
    #allocation8 [shape = 'u8[8192]{0}', space=vmem, size = 0x2000, scoped, tag = 'input window, operand 1, single buffered']
    #allocation9 [shape = 's32[1]{0}', space=sflag, size = 0x4, scoped, tag = 'scoped memory for tpu_custom_call.1']
    %9 = vsyncpa [#allocation7], 0
    %10 = vsyncpa [#allocation9], 0
    // Predicated region
    $region2: #{tpu_custom_call.1} parent=1 // pred_check
      _
    $region3: #{tpu_custom_call.1} parent=1 // pred_check_branch
      %12 = sbr.rel (0) target = $region5
    $region4: #{tpu_custom_call.1} parent=1 // pred_region
      %s14 = ssub.s32 256, 256
      %15 = vsyncadd [#allocation7], %s14
      %s17 = sshll.u32 [#allocation6], 4
      %s18 = int_to_ptr.vmem [resolvable:$true] %s17
      %20 = dma.hbm_to_vmem [thread:$0]  %s0, 256, %s18, [#allocation7]
    $region5: #{tpu_custom_call.1} parent=1 // pred_fallthru
      _
    // Predicated region
    $region6: #{tpu_custom_call.1} parent=1 // pred_check
      _
    $region7: #{tpu_custom_call.1} parent=1 // pred_check_branch
      %22 = sbr.rel (0) target = $region9
    $region8: #{tpu_custom_call.1} parent=1 // pred_region
      %s24 = ssub.s32 256, 256
      %25 = vsyncadd [#allocation9], %s24
      %s27 = sshll.u32 [#allocation8], 4
      %s28 = int_to_ptr.vmem [resolvable:$true] %s27
      %30 = dma.hbm_to_vmem [thread:$0]  %s1, 256, %s28, [#allocation9]
    $region9: #{tpu_custom_call.1} parent=1 // pred_fallthru
      _
    // Predicated region
    $region10: #{tpu_custom_call.1} parent=1 // pred_check
      _
    $region11: #{tpu_custom_call.1} parent=1 // pred_check_branch
      %32 = sbr.rel (0) target = $region13
    $region12: #{tpu_custom_call.1} parent=1 // pred_region
      %33 = dma.done [#allocation7], 256
    $region13: #{tpu_custom_call.1} parent=1 // pred_fallthru
      _
    // Predicated region
    $region14: #{tpu_custom_call.1} parent=1 // pred_check
      _
    $region15: #{tpu_custom_call.1} parent=1 // pred_check_branch
      %35 = sbr.rel (0) target = $region17
    $region16: #{tpu_custom_call.1} parent=1 // pred_region
      %36 = dma.done [#allocation9], 256
    $region17: #{tpu_custom_call.1} parent=1 // pred_fallthru
      _
    %p37 = scmp.eq.s32.totalorder 0, 0
    // Predicated region
    $region18: #{tpu_custom_call.1} parent=1 // pred_check
      %p38 = pneg %p37
    $region19: #{tpu_custom_call.1} parent=1 // pred_check_branch
      %40 = sbr.rel (%p38) target = $region21
    $region20: #{tpu_custom_call.1} parent=1 // pred_region
      %vm41 = vcmask 7168
      %42 = vst.msk [vmem:[#allocation2] sm:$0xff] %vm41, 0.0
      %43 = vst.msk [vmem:[#allocation3] sm:$0xff] %vm41, 0.0
      %44 = vst.msk [vmem:[#allocation4] sm:$0xff] %vm41, 0.0
      %45 = vst.msk [vmem:[#allocation5] sm:$0xff] %vm41, 0.0
    $region21: #{tpu_custom_call.1} parent=1 // pred_fallthru
      _
    %v46 = vld [vmem:[#allocation6] sm:$0xff]
    %v47 = vld [vmem:[#allocation6 + $0x8] sm:$0xff]
    %v48 = vld [vmem:[#allocation8] sm:$0xff]
    %v49 = vld [vmem:[#allocation8 + $0x8] sm:$0xff]
    %v50 = vand.u32 2147483647, %v46
    %v51 = vand.u32 2147483647, %v47
    %v52 = vsub.f32 0.0, %v50
    %v53 = vsub.f32 0.0, %v51
    %v54 = vmul.f32 %v52, 1.442695
    %v55 = vpow.pop %v54
    %v56 = vmul.f32 %v53, 1.442695
    %v57 = vpow.pop %v56
    %v58 = vmax.f32 %v46, 0.0
    %v59 = vmax.f32 %v47, 0.0
    %v60 = vmul.f32 %v46, %v48
    %v61 = vmul.f32 %v47, %v49
    %v62 = vsub.f32 %v58, %v60
    %v63 = vsub.f32 %v59, %v61
    %v64 = vadd.f32 %v55, 1.0
    %v65 = vlog2.pop %v64
    %v66 = vmul.f32 %v65, 0.6931472
    %v67 = vmul.f32 -0.5, %v55
    %v68 = vadd.f32 %v67, 1.0
    %v69 = vmul.f32 %v68, %v55
    %v70 = vand.u32 2147483647, %v55
    %vm71 = vcmp.lt.f32.partialorder %v70, 0.0004427343
    %v72 = vsel %vm71, %v69, %v66
    %v73 = vadd.f32 %v57, 1.0
    %v74 = vlog2.pop %v73
    %v75 = vmul.f32 %v74, 0.6931472
    %v76 = vmul.f32 -0.5, %v57
    %v77 = vadd.f32 %v76, 1.0
    %v78 = vmul.f32 %v77, %v57
    %v79 = vand.u32 2147483647, %v57
    %vm80 = vcmp.lt.f32.partialorder %v79, 0.0004427343
    %v81 = vsel %vm80, %v78, %v75
    %v82 = vadd.f32 %v62, %v72
    %v83 = vadd.f32 %v63, %v81
    %v84 = vadd.f32 %v55, 1.0
    %v85 = vadd.f32 %v57, 1.0
    %v86 = vrcp.pop %v84
    %v87 = vmul.f32 1.0, %v86
    %v88 = vrcp.pop %v85
    %v89 = vmul.f32 1.0, %v88
    %vm90 = vcmp.ge.f32.partialorder %v46, 0.0
    %vm91 = vcmp.ge.f32.partialorder %v47, 0.0
    %v92 = vmul.f32 %v55, %v87
    %v93 = vmul.f32 %v57, %v89
    %v94 = vsel %vm90, %v87, %v92
    %v95 = vsel %vm91, %v89, %v93
    %v96 = vld [vmem:[#allocation5] sm:$0xff]
    %v97 = vadd.f32 %v82, %v83
    %98 = vadd.xlane.f32.xlu0 %v97
    %v99 = vpop.xlane.xlu0 %98
    %v100 = vadd.f32 %v96, %v99
    %vm101 = vcmask 7168
    %102 = vst.msk [vmem:[#allocation5] sm:$0xff] %vm101, %v100
    %v103 = vld [vmem:[#allocation2] sm:$0xff]
    %v104 = vmul.f32 %v94, %v48
    %v105 = vmul.f32 %v95, %v49
    %v106 = vadd.f32 %v104, %v105
    %107 = vadd.xlane.f32.xlu0 %v106
    %v108 = vpop.xlane.xlu0 %107
    %v109 = vadd.f32 %v103, %v108
    %110 = vst.msk [vmem:[#allocation2] sm:$0xff] %vm101, %v109
    %v111 = vld [vmem:[#allocation3] sm:$0xff]
    %v112 = vadd.f32 %v94, %v95
    %113 = vadd.xlane.f32.xlu0 %v112
    %v114 = vpop.xlane.xlu0 %113
    %v115 = vadd.f32 %v111, %v114
    %116 = vst.msk [vmem:[#allocation3] sm:$0xff] %vm101, %v115
    %v117 = vld [vmem:[#allocation4] sm:$0xff]
    %v118 = vadd.f32 %v48, %v49
    %119 = vadd.xlane.f32.xlu0 %v118
    %v120 = vpop.xlane.xlu0 %119
    %v121 = vadd.f32 %v117, %v120
    %122 = vst.msk [vmem:[#allocation4] sm:$0xff] %vm101, %v121
    // Predicated region
    $region22: #{tpu_custom_call.1} parent=1 // pred_check
      %p123 = pneg %p37
    $region23: #{tpu_custom_call.1} parent=1 // pred_check_branch
      %125 = sbr.rel (%p123) target = $region25
    $region24: #{tpu_custom_call.1} parent=1 // pred_region
      %v126 = vld [vmem:[#allocation2] sm:$0xff]
      %v127 = vmul.f32 %v126, 2.0
      %v128 = vld [vmem:[#allocation3] sm:$0xff]
      %v129 = vld [vmem:[#allocation4] sm:$0xff]
      %v130 = vadd.f32 %v128, %v129
      %v131 = vadd.f32 %v130, 0.0001
      %v132 = vrcp.pop %v131
      %v133 = vmul.f32 %v127, %v132
      %v134 = vsub.f32 1.0, %v133
      %135 = vst.msk [vmem:[%s3] sm:$0xff] %vm101, %v134
      %v136 = vld [vmem:[#allocation5] sm:$0xff]
      %137 = vst.msk [vmem:[%s2] sm:$0xff] %vm101, %v136
    $region25: #{tpu_custom_call.1} parent=1 // pred_fallthru
      _
    // Predicated region
    $region26: #{tpu_custom_call.1} parent=1 // pred_check
      _
    $region27: #{tpu_custom_call.1} parent=1 // pred_check_branch
      %139 = sbr.rel (0) target = $region29
    $region28: #{tpu_custom_call.1} parent=1 // pred_region
      _
    $region29: #{tpu_custom_call.1} parent=1 // pred_fallthru
      _
    // Predicated region
    $region30: #{tpu_custom_call.1} parent=1 // pred_check
      _
    $region31: #{tpu_custom_call.1} parent=1 // pred_check_branch
      %141 = sbr.rel (0) target = $region33
    $region32: #{tpu_custom_call.1} parent=1 // pred_region
      _
    $region33: #{tpu_custom_call.1} parent=1 // pred_fallthru
      _
    // Predicated region
    $region34: #{tpu_custom_call.1} parent=1 // pred_check
      _
    $region35: #{tpu_custom_call.1} parent=1 // pred_check_branch
      %143 = sbr.rel (0) target = $region37
    $region36: #{tpu_custom_call.1} parent=1 // pred_region
      _
    $region37: #{tpu_custom_call.1} parent=1 // pred_fallthru
      _
    // Predicated region
    $region38: #{tpu_custom_call.1} parent=1 // pred_check
      _
    $region39: #{tpu_custom_call.1} parent=1 // pred_check_branch
      %145 = sbr.rel (0) target = $region41
    $region40: #{tpu_custom_call.1} parent=1 // pred_region
      _
    $region41: #{tpu_custom_call.1} parent=1 // pred_fallthru
      _
    %146 = vsyncpa [#allocation7], 1
    %147 = vsyncpa [#allocation9], 1

</llo_original>
